<compile_context>
chip_gen: v7x
topology: tpu7x:2x2x1
jax: 0.10.0
libtpu: 0.0.40
codegen_flags: <defaults>
</compile_context>

<pallas_src>
import jax
import jax.numpy as jnp
from jax.experimental import pallas as pl
from jax.experimental.pallas import tpu as pltpu


def _wbce_kernel(yt_ref, yp_ref, partial_ref):
    """Per-block partial sum of mse * certainty_weights, shaped (8, LANE)."""
    yt = yt_ref[...].astype(jnp.float32)
    yp = yp_ref[...].astype(jnp.float32)

    diff = yp - yt
    d5 = yp - 0.5
    # mse * certainty_weights  ==  diff^2 * (|yp-0.5|/0.5)^2  ==  diff^2 * 4*(yp-0.5)^2
    val = (diff * diff) * (4.0 * (d5 * d5))

    tr, tc = val.shape
    # Major-dim split is a free reshape in the (8,128) tiled layout; the sum
    # over row-groups lowers to plain VPU adds (no XLU, no scalar RMW chain).
    partial_ref[...] = jnp.sum(val.reshape(tr // 8, 8, tc), axis=0)


def _round_up(x, m):
    return ((x + m - 1) // m) * m


def weighted_bce_loss(y_true, y_pred, *, lane=512, block_rows=1024):
    """Pallas implementation of WeightedBceLoss.forward. Returns a scalar f32."""
    assert y_true.shape == y_pred.shape
    assert lane % 128 == 0 and block_rows % 8 == 0

    n_elems = y_true.size

    yt = jnp.ravel(y_true)
    yp = jnp.ravel(y_pred)

    rows = -(-n_elems // lane)                        # cdiv(N, lane)
    tile_rows = min(block_rows, _round_up(rows, 8))   # shrink tile for tiny inputs
    rows_padded = _round_up(rows, tile_rows)
    total_padded = rows_padded * lane

    pad = total_padded - n_elems
    if pad:
        # Zero padding is safe: diff == 0 -> padded contribution is exactly 0.
        yt = jnp.pad(yt, (0, pad))
        yp = jnp.pad(yp, (0, pad))

    yt2 = jnp.reshape(yt, (rows_padded, lane))
    yp2 = jnp.reshape(yp, (rows_padded, lane))

    num_blocks = rows_padded // tile_rows

    partials = pl.pallas_call(
        _wbce_kernel,
        out_shape=jax.ShapeDtypeStruct((num_blocks * 8, lane), jnp.float32),
        grid_spec=pl.GridSpec(
            grid=(num_blocks,),
            in_specs=[
                pl.BlockSpec((tile_rows, lane), lambda i: (i, 0)),
                pl.BlockSpec((tile_rows, lane), lambda i: (i, 0)),
            ],
            out_specs=pl.BlockSpec((8, lane), lambda i: (i, 0)),
        ),
        compiler_params=pltpu.CompilerParams(
            dimension_semantics=("parallel",),
            vmem_limit_bytes=32 * 1024 * 1024,
        ),
    )(yt2, yp2)

    # Tiny final reduce of per-block partials; divide by the UNPADDED count.
    return jnp.sum(partials) * (1.0 / float(n_elems))


def weighted_bce_loss_ref(y_true, y_pred):
    yt = y_true.astype(jnp.float32)
    yp = y_pred.astype(jnp.float32)
    mse = (yp - yt) ** 2
    cw = (jnp.abs(yp - 0.5) / 0.5) ** 2
    return jnp.mean(mse * cw)


if __name__ == "__main__":
    key = jax.random.PRNGKey(0)
    k1, k2, k3, k4 = jax.random.split(key, 4)

    # NCHW prediction/target pair, small shapes.
    shape = (2, 4, 16, 16)
    y_true = (jax.random.uniform(k1, shape) > 0.5).astype(jnp.float32)
    y_pred = jax.random.uniform(k2, shape, dtype=jnp.float32)

    loss = jax.block_until_ready(weighted_bce_loss(y_true, y_pred))
    ref = jax.block_until_ready(weighted_bce_loss_ref(y_true, y_pred))
    assert jnp.allclose(loss, ref, rtol=1e-5, atol=1e-6), (loss, ref)

    # Odd-sized shape to exercise the flat zero-padding path.
    shape2 = (2, 3, 17, 9)
    y_true2 = (jax.random.uniform(k3, shape2) > 0.5).astype(jnp.float32)
    y_pred2 = jax.random.uniform(k4, shape2, dtype=jnp.float32)

    loss2 = jax.block_until_ready(weighted_bce_loss(y_true2, y_pred2))
    ref2 = jax.block_until_ready(weighted_bce_loss_ref(y_true2, y_pred2))
    assert jnp.allclose(loss2, ref2, rtol=1e-5, atol=1e-6), (loss2, ref2)

    print("KERNEL_OK")
</pallas_src>

<mosaic_0001>
module attributes {stable_mosaic.version = 11 : i64} {
  func.func @_wbce_kernel(%arg0: i32, %arg1: memref<8x512xf32, #tpu.memory_space<vmem>>, %arg2: memref<8x512xf32, #tpu.memory_space<vmem>>, %arg3: memref<8x512xf32, #tpu.memory_space<vmem>>) attributes {dimension_semantics = [#tpu.dimension_semantics<parallel>], iteration_bounds = array<i64: 1>, scalar_prefetch = 0 : i64, scratch_operands = 0 : i64, tpu.core_type = #tpu.core_type<tc>, window_params = [{transform_indices = @transform_0, window_bounds = array<i64: 8, 512>}, {transform_indices = @transform_1, window_bounds = array<i64: 8, 512>}, {transform_indices = @transform_2, window_bounds = array<i64: 8, 512>}]} {
    %c0 = arith.constant 0 : index
    %c0_0 = arith.constant 0 : index
    %0 = vector.load %arg1[%c0, %c0_0] : memref<8x512xf32, #tpu.memory_space<vmem>>, vector<8x512xf32>
    %c0_1 = arith.constant 0 : index
    %c0_2 = arith.constant 0 : index
    %1 = vector.load %arg2[%c0_1, %c0_2] : memref<8x512xf32, #tpu.memory_space<vmem>>, vector<8x512xf32>
    %2 = arith.subf %1, %0 : vector<8x512xf32>
    %cst = arith.constant 5.000000e-01 : f32
    %3 = vector.broadcast %cst : f32 to vector<8x512xf32>
    %4 = arith.subf %1, %3 : vector<8x512xf32>
    %5 = arith.mulf %2, %2 : vector<8x512xf32>
    %6 = arith.mulf %4, %4 : vector<8x512xf32>
    %cst_3 = arith.constant 4.000000e+00 : f32
    %7 = vector.broadcast %cst_3 : f32 to vector<8x512xf32>
    %8 = arith.mulf %7, %6 : vector<8x512xf32>
    %9 = arith.mulf %5, %8 : vector<8x512xf32>
    %10 = vector.shape_cast %9 : vector<8x512xf32> to vector<1x8x512xf32>
    %cst_4 = arith.constant dense<0.000000e+00> : vector<8x512xf32>
    %11 = vector.multi_reduction <add>, %10, %cst_4 [0] : vector<1x8x512xf32> to vector<8x512xf32>
    %c0_5 = arith.constant 0 : index
    %c0_6 = arith.constant 0 : index
    %12 = vector.load %arg3[%c0_5, %c0_6] : memref<8x512xf32, #tpu.memory_space<vmem>>, vector<8x512xf32>
    tpu.vector_store %arg3[%c0_5, %c0_6], %11 {strides = array<i32>} : memref<8x512xf32, #tpu.memory_space<vmem>>, vector<8x512xf32>,
    return
  }
  func.func @transform_0(%arg0: i32) -> (i32, i32) {
    %c0_i32 = arith.constant 0 : i32
    %c0_i32_0 = arith.constant 0 : i32
    return %arg0, %c0_i32 : i32, i32
  }
  func.func @transform_1(%arg0: i32) -> (i32, i32) {
    %c0_i32 = arith.constant 0 : i32
    %c0_i32_0 = arith.constant 0 : i32
    return %arg0, %c0_i32 : i32, i32
  }
  func.func @transform_2(%arg0: i32) -> (i32, i32) {
    %c0_i32 = arith.constant 0 : i32
    %c0_i32_0 = arith.constant 0 : i32
    return %arg0, %c0_i32 : i32, i32
  }
}

</mosaic_0001>

<llo_original>
// kernel: tpu_custom_call.1
$region0: #{tpu_custom_call.1}
  #allocation0 [shape = 'u32[]', space=smem, size = 0x4, offset = 0x4, fixed_abs, tag = 'smem constant byte address 0x4 - core index']
  #allocation1 [shape = 'u32[144,128]{1,0:T(1,128)}', space=vmem, size = 0x12000, scoped, tag = 'internal scratch']
  %s0 = inlined_call_operand.hbm [shape: f32[8,512], index: 0, kind: input, shape index: {}]
  %s1 = inlined_call_operand.hbm [shape: f32[8,512], index: 1, kind: input, shape index: {}]
  %s2 = inlined_call_operand.hbm [shape: f32[8,512], index: 2, kind: output, shape index: {}]
  %s3 = sld [smem:[#allocation0]]
  $region26: #{tpu_custom_call.1} parent=0
    _
  %s5 = ssub.s32 1, %s3
  %s6 = scalar_select 0, %s5, %s3
  $region1: #{tpu_custom_call.1} parent=0
    #allocation2 [shape = 'u8[16384]{0}', space=vmem, size = 0x4000, scoped, tag = 'input window, operand 0, single buffered']
    #allocation3 [shape = 's32[1]{0}', space=sflag, size = 0x4, scoped, tag = 'scoped memory for tpu_custom_call.1']
    #allocation4 [shape = 's32[1]{0}', space=sflag, size = 0x4, scoped, tag = 'scoped memory for tpu_custom_call.1']
    #allocation5 [shape = 'u8[16384]{0}', space=vmem, size = 0x4000, scoped, tag = 'input window, operand 1, single buffered']
    #allocation6 [shape = 's32[1]{0}', space=sflag, size = 0x4, scoped, tag = 'scoped memory for tpu_custom_call.1']
    #allocation7 [shape = 'u8[16384]{0}', space=vmem, size = 0x4000, scoped, tag = 'output window, operand 0, single buffered']
    %7 = vsyncpa [#allocation3], 0
    %8 = vsyncpa [#allocation6], 0
    %9 = vsyncpa [#allocation4], 0
    // Predicated region
    $region2: #{tpu_custom_call.1} parent=1 // pred_check
      _
    $region3: #{tpu_custom_call.1} parent=1 // pred_check_branch
      %11 = sbr.rel (0) target = $region5
    $region4: #{tpu_custom_call.1} parent=1 // pred_region
      %s13 = ssub.s32 512, 512
      %14 = vsyncadd [#allocation3], %s13
      %s16 = sshll.u32 [#allocation2], 4
      %s17 = int_to_ptr.vmem [resolvable:$true] %s16
      %19 = dma.hbm_to_vmem [thread:$0]  %s0, 512, %s17, [#allocation3]
    $region5: #{tpu_custom_call.1} parent=1 // pred_fallthru
      _
    // Predicated region
    $region6: #{tpu_custom_call.1} parent=1 // pred_check
      _
    $region7: #{tpu_custom_call.1} parent=1 // pred_check_branch
      %21 = sbr.rel (0) target = $region9
    $region8: #{tpu_custom_call.1} parent=1 // pred_region
      %s23 = ssub.s32 512, 512
      %24 = vsyncadd [#allocation6], %s23
      %s26 = sshll.u32 [#allocation5], 4
      %s27 = int_to_ptr.vmem [resolvable:$true] %s26
      %29 = dma.hbm_to_vmem [thread:$0]  %s1, 512, %s27, [#allocation6]
    $region9: #{tpu_custom_call.1} parent=1 // pred_fallthru
      _
    // Predicated region
    $region10: #{tpu_custom_call.1} parent=1 // pred_check
      _
    $region11: #{tpu_custom_call.1} parent=1 // pred_check_branch
      %31 = sbr.rel (0) target = $region13
    $region12: #{tpu_custom_call.1} parent=1 // pred_region
      %32 = dma.done [#allocation3], 512
    $region13: #{tpu_custom_call.1} parent=1 // pred_fallthru
      _
    // Predicated region
    $region14: #{tpu_custom_call.1} parent=1 // pred_check
      _
    $region15: #{tpu_custom_call.1} parent=1 // pred_check_branch
      %34 = sbr.rel (0) target = $region17
    $region16: #{tpu_custom_call.1} parent=1 // pred_region
      %35 = dma.done [#allocation6], 512
    $region17: #{tpu_custom_call.1} parent=1 // pred_fallthru
      _
    %v36 = vld [vmem:[#allocation2] sm:$0xff]
    %v37 = vld [vmem:[#allocation2 + $0x8] sm:$0xff]
    %v38 = vld [vmem:[#allocation2 + $0x10] sm:$0xff]
    %v39 = vld [vmem:[#allocation2 + $0x18] sm:$0xff]
    %v40 = vld [vmem:[#allocation5] sm:$0xff]
    %v41 = vld [vmem:[#allocation5 + $0x8] sm:$0xff]
    %v42 = vld [vmem:[#allocation5 + $0x10] sm:$0xff]
    %v43 = vld [vmem:[#allocation5 + $0x18] sm:$0xff]
    %v44 = vsub.f32 %v40, %v36
    %v45 = vsub.f32 %v41, %v37
    %v46 = vsub.f32 %v42, %v38
    %v47 = vsub.f32 %v43, %v39
    %v48 = vsub.f32 %v40, 0.5
    %v49 = vsub.f32 %v41, 0.5
    %v50 = vsub.f32 %v42, 0.5
    %v51 = vsub.f32 %v43, 0.5
    %v52 = vmul.f32 %v44, %v44
    %v53 = vmul.f32 %v45, %v45
    %v54 = vmul.f32 %v46, %v46
    %v55 = vmul.f32 %v47, %v47
    %v56 = vmul.f32 %v48, %v48
    %v57 = vmul.f32 %v49, %v49
    %v58 = vmul.f32 %v50, %v50
    %v59 = vmul.f32 %v51, %v51
    %v60 = vmul.f32 %v56, 4.0
    %v61 = vmul.f32 %v57, 4.0
    %v62 = vmul.f32 %v58, 4.0
    %v63 = vmul.f32 %v59, 4.0
    %v64 = vmul.f32 %v52, %v60
    %v65 = vmul.f32 %v53, %v61
    %v66 = vmul.f32 %v54, %v62
    %v67 = vmul.f32 %v55, %v63
    %v68 = vadd.f32 %v64, 0.0
    %v69 = vadd.f32 %v65, 0.0
    %v70 = vadd.f32 %v66, 0.0
    %v71 = vadd.f32 %v67, 0.0
    %72 = vst [vmem:[#allocation7] sm:$0xff] %v68
    %73 = vst [vmem:[#allocation7 + $0x8] sm:$0xff] %v69
    %74 = vst [vmem:[#allocation7 + $0x10] sm:$0xff] %v70
    %75 = vst [vmem:[#allocation7 + $0x18] sm:$0xff] %v71
    // Predicated region
    $region18: #{tpu_custom_call.1} parent=1 // pred_check
      _
    $region19: #{tpu_custom_call.1} parent=1 // pred_check_branch
      %77 = sbr.rel (0) target = $region21
    $region20: #{tpu_custom_call.1} parent=1 // pred_region
      %s79 = ssub.s32 512, 512
      %80 = vsyncadd [#allocation4], %s79
      %s82 = sshll.u32 [#allocation7], 4
      %s83 = int_to_ptr.vmem [resolvable:$true] %s82
      %85 = dma.vmem_to_hbm [thread:$0]  %s83, 512, %s2, [#allocation4]
    $region21: #{tpu_custom_call.1} parent=1 // pred_fallthru
      _
    // Predicated region
    $region22: #{tpu_custom_call.1} parent=1 // pred_check
      _
    $region23: #{tpu_custom_call.1} parent=1 // pred_check_branch
      %87 = sbr.rel (0) target = $region25
    $region24: #{tpu_custom_call.1} parent=1 // pred_region
      %88 = dma.done [#allocation4], 512
    $region25: #{tpu_custom_call.1} parent=1 // pred_fallthru
      _
    %89 = vsyncpa [#allocation3], 1
    %90 = vsyncpa [#allocation6], 1
    %91 = vsyncpa [#allocation4], 1

</llo_original>
